<compile_context>
chip_gen: v7x
topology: tpu7x:2x2x1
jax: 0.10.0
libtpu: 0.0.40
codegen_flags: <defaults>
</compile_context>

<pallas_src>
import jax
import jax.numpy as jnp
from jax.experimental import pallas as pl
from jax.experimental.pallas import tpu as pltpu


# ----------------------------------------------------------------------------
# Fused Pallas kernel
#   mean    = x @ Wm + bm
#   log_var = x @ Wv + bv
#   z       = mean + exp(log_var/2) * eps
#   x_hat   = tanh(z @ Wd + bd)
#   kld_row = sum_j (1 + log_var - mean^2 - exp(log_var))      (per batch row)
# ----------------------------------------------------------------------------
def _vae_fused_kernel(x_ref, eps_ref,
                      wm_ref, bm_ref, wv_ref, bv_ref, wd_ref, bd_ref,
                      z_ref, xhat_ref, kld_ref):
    x = x_ref[...]                                               # (Tb, Din)

    mean = jnp.dot(x, wm_ref[...],
                   preferred_element_type=jnp.float32) + bm_ref[...]
    log_var = jnp.dot(x, wv_ref[...],
                      preferred_element_type=jnp.float32) + bv_ref[...]

    std = jnp.exp(0.5 * log_var)                                 # EUP
    z = mean + std * eps_ref[...]
    z_ref[...] = z.astype(z_ref.dtype)

    dec = jnp.dot(z, wd_ref[...],
                  preferred_element_type=jnp.float32) + bd_ref[...]
    xhat_ref[...] = jnp.tanh(dec).astype(xhat_ref.dtype)         # EUP tanh

    # per-row KLD partial sums; final scalar reduction happens outside.
    kld_ref[...] = jnp.sum(1.0 + log_var - mean * mean - jnp.exp(log_var),
                           axis=-1, keepdims=True).astype(kld_ref.dtype)


def vae1layer_forward(x, eps, params):
    """x: (B, Din) f32, eps: (B, Dout) f32  ->  (z, x_hat, kld)."""
    B, D_in = x.shape
    D_out = params["w_mean"].shape[0]            # torch Linear: (out, in)

    # Trace-time weight transposes (zero runtime cost inside the kernel).
    wm = params["w_mean"].T                      # (Din, Dout)
    wv = params["w_logvar"].T                    # (Din, Dout)
    wd = params["w_dec"].T                       # (Dout, Din)
    bm = params["b_mean"].reshape(1, D_out)
    bv = params["b_logvar"].reshape(1, D_out)
    bd = params["b_dec"].reshape(1, D_in)

    # Batch tiling: full-batch block for small B, otherwise 256-row tiles
    # (multiple of 8 sublanes) -> pipelined + megacore-shardable.
    tile_b = B if B <= 256 else 256
    grid_m = pl.cdiv(B, tile_b)

    z, x_hat, kld_rows = pl.pallas_call(
        _vae_fused_kernel,
        out_shape=(
            jax.ShapeDtypeStruct((B, D_out), jnp.float32),   # z (reparameterized)
            jax.ShapeDtypeStruct((B, D_in), jnp.float32),    # x_hat
            jax.ShapeDtypeStruct((B, 1), jnp.float32),       # per-row KLD terms
        ),
        grid=(grid_m,),
        in_specs=[
            pl.BlockSpec((tile_b, D_in), lambda i: (i, 0)),    # x
            pl.BlockSpec((tile_b, D_out), lambda i: (i, 0)),   # eps
            pl.BlockSpec((D_in, D_out), lambda i: (0, 0)),     # Wm (resident)
            pl.BlockSpec((1, D_out), lambda i: (0, 0)),        # bm
            pl.BlockSpec((D_in, D_out), lambda i: (0, 0)),     # Wv
            pl.BlockSpec((1, D_out), lambda i: (0, 0)),        # bv
            pl.BlockSpec((D_out, D_in), lambda i: (0, 0)),     # Wd
            pl.BlockSpec((1, D_in), lambda i: (0, 0)),         # bd
        ],
        out_specs=(
            pl.BlockSpec((tile_b, D_out), lambda i: (i, 0)),
            pl.BlockSpec((tile_b, D_in), lambda i: (i, 0)),
            pl.BlockSpec((tile_b, 1), lambda i: (i, 0)),
        ),
        compiler_params=pltpu.CompilerParams(
            dimension_semantics=("parallel",)),
    )(x, eps, wm, bm, wv, bv, wd, bd)

    kld = -0.5 * jnp.sum(kld_rows) / (D_in * B)
    return z, x_hat, kld


# ----------------------------------------------------------------------------
# Pure-JAX reference for verification
# ----------------------------------------------------------------------------
def reference_forward(x, eps, params):
    B, D_in = x.shape
    mean = x @ params["w_mean"].T + params["b_mean"]
    log_var = x @ params["w_logvar"].T + params["b_logvar"]
    std = jnp.exp(log_var / 2.0)
    z = mean + std * eps
    x_hat = jnp.tanh(z @ params["w_dec"].T + params["b_dec"])
    kld = -0.5 * jnp.sum(1.0 + log_var - mean ** 2 - jnp.exp(log_var)) / (D_in * B)
    return z, x_hat, kld


# ----------------------------------------------------------------------------
# Parameter construction (matches PyTorch weights_init: N(0, 0.002), bias = 0)
# ----------------------------------------------------------------------------
def make_params(key, input_dim, output_dim):
    k1, k2, k3 = jax.random.split(key, 3)
    n = lambda k, s: 0.002 * jax.random.normal(k, s, jnp.float32)
    return {
        "w_mean": n(k1, (output_dim, input_dim)),
        "b_mean": jnp.zeros((output_dim,), jnp.float32),
        "w_logvar": n(k2, (output_dim, input_dim)),
        "b_logvar": jnp.zeros((output_dim,), jnp.float32),
        "w_dec": n(k3, (input_dim, output_dim)),
        "b_dec": jnp.zeros((input_dim,), jnp.float32),
    }


if __name__ == "__main__":
    batch, input_dim, output_dim = 8, 64, 32

    key = jax.random.PRNGKey(0)
    k_x, k_e, k_p = jax.random.split(key, 3)
    x = jax.random.normal(k_x, (batch, input_dim), jnp.float32)
    # TODO(synk): torch.randn_like noise is generated host-side (jax.random)
    # so the kernel is deterministic and checkable against the reference.
    eps = jax.random.normal(k_e, (batch, output_dim), jnp.float32)
    params = make_params(k_p, input_dim, output_dim)

    z, x_hat, kld = vae1layer_forward(x, eps, params)
    z, x_hat, kld = jax.block_until_ready((z, x_hat, kld))

    z_ref, xhat_ref, kld_ref = reference_forward(x, eps, params)

    assert z.shape == (batch, output_dim)
    assert x_hat.shape == (batch, input_dim)
    assert jnp.allclose(z, z_ref, atol=1e-4, rtol=1e-3), (
        float(jnp.max(jnp.abs(z - z_ref))))
    assert jnp.allclose(x_hat, xhat_ref, atol=1e-4, rtol=1e-3), (
        float(jnp.max(jnp.abs(x_hat - xhat_ref))))
    assert jnp.allclose(kld, kld_ref, atol=1e-4, rtol=1e-3), (
        float(jnp.abs(kld - kld_ref)))

    print("KERNEL_OK")
</pallas_src>

<mosaic_0001>
module attributes {stable_mosaic.version = 11 : i64} {
  func.func @_vae_fused_kernel(%arg0: i32, %arg1: memref<8x64xf32, #tpu.memory_space<vmem>>, %arg2: memref<8x32xf32, #tpu.memory_space<vmem>>, %arg3: memref<64x32xf32, #tpu.memory_space<vmem>>, %arg4: memref<1x32xf32, #tpu.memory_space<vmem>>, %arg5: memref<64x32xf32, #tpu.memory_space<vmem>>, %arg6: memref<1x32xf32, #tpu.memory_space<vmem>>, %arg7: memref<32x64xf32, #tpu.memory_space<vmem>>, %arg8: memref<1x64xf32, #tpu.memory_space<vmem>>, %arg9: memref<8x32xf32, #tpu.memory_space<vmem>>, %arg10: memref<8x64xf32, #tpu.memory_space<vmem>>, %arg11: memref<8x1xf32, #tpu.memory_space<vmem>>) attributes {dimension_semantics = [#tpu.dimension_semantics<parallel>], iteration_bounds = array<i64: 1>, scalar_prefetch = 0 : i64, scratch_operands = 0 : i64, tpu.core_type = #tpu.core_type<tc>, window_params = [{transform_indices = @transform_0, window_bounds = array<i64: 8, 64>}, {transform_indices = @transform_1, window_bounds = array<i64: 8, 32>}, {pipeline_mode = #tpu.pipeline_mode<synchronous>, transform_indices = @transform_2, window_bounds = array<i64: 64, 32>}, {pipeline_mode = #tpu.pipeline_mode<synchronous>, transform_indices = @transform_3, window_bounds = array<i64: 1, 32>}, {pipeline_mode = #tpu.pipeline_mode<synchronous>, transform_indices = @transform_4, window_bounds = array<i64: 64, 32>}, {pipeline_mode = #tpu.pipeline_mode<synchronous>, transform_indices = @transform_5, window_bounds = array<i64: 1, 32>}, {pipeline_mode = #tpu.pipeline_mode<synchronous>, transform_indices = @transform_6, window_bounds = array<i64: 32, 64>}, {pipeline_mode = #tpu.pipeline_mode<synchronous>, transform_indices = @transform_7, window_bounds = array<i64: 1, 64>}, {transform_indices = @transform_8, window_bounds = array<i64: 8, 32>}, {transform_indices = @transform_9, window_bounds = array<i64: 8, 64>}, {transform_indices = @transform_10, window_bounds = array<i64: 8, 1>}]} {
    %c0 = arith.constant 0 : index
    %c0_0 = arith.constant 0 : index
    %0 = vector.load %arg1[%c0, %c0_0] : memref<8x64xf32, #tpu.memory_space<vmem>>, vector<8x64xf32>
    %c0_1 = arith.constant 0 : index
    %c0_2 = arith.constant 0 : index
    %1 = vector.load %arg3[%c0_1, %c0_2] : memref<64x32xf32, #tpu.memory_space<vmem>>, vector<64x32xf32>
    %cst = arith.constant dense<0.000000e+00> : vector<8x32xf32>
    %2 = tpu.matmul %0, %1, %cst {dimension_numbers = #tpu.dot_dimension_numbers<[1], [0], [0], [1], [0, 0, 1, 1], [], []>} : vector<8x64xf32>, vector<64x32xf32>, vector<8x32xf32> -> vector<8x32xf32>
    %c0_3 = arith.constant 0 : index
    %c0_4 = arith.constant 0 : index
    %3 = vector.load %arg4[%c0_3, %c0_4] : memref<1x32xf32, #tpu.memory_space<vmem>>, vector<1x32xf32>
    %4 = vector.broadcast %3 : vector<1x32xf32> to vector<8x32xf32>
    %5 = arith.addf %2, %4 : vector<8x32xf32>
    %c0_5 = arith.constant 0 : index
    %c0_6 = arith.constant 0 : index
    %6 = vector.load %arg5[%c0_5, %c0_6] : memref<64x32xf32, #tpu.memory_space<vmem>>, vector<64x32xf32>
    %cst_7 = arith.constant dense<0.000000e+00> : vector<8x32xf32>
    %7 = tpu.matmul %0, %6, %cst_7 {dimension_numbers = #tpu.dot_dimension_numbers<[1], [0], [0], [1], [0, 0, 1, 1], [], []>} : vector<8x64xf32>, vector<64x32xf32>, vector<8x32xf32> -> vector<8x32xf32>
    %c0_8 = arith.constant 0 : index
    %c0_9 = arith.constant 0 : index
    %8 = vector.load %arg6[%c0_8, %c0_9] : memref<1x32xf32, #tpu.memory_space<vmem>>, vector<1x32xf32>
    %9 = vector.broadcast %8 : vector<1x32xf32> to vector<8x32xf32>
    %10 = arith.addf %7, %9 : vector<8x32xf32>
    %cst_10 = arith.constant 5.000000e-01 : f32
    %11 = vector.broadcast %cst_10 : f32 to vector<8x32xf32>
    %12 = arith.mulf %11, %10 : vector<8x32xf32>
    %13 = math.exp %12 : vector<8x32xf32>
    %c0_11 = arith.constant 0 : index
    %c0_12 = arith.constant 0 : index
    %14 = vector.load %arg2[%c0_11, %c0_12] : memref<8x32xf32, #tpu.memory_space<vmem>>, vector<8x32xf32>
    %15 = arith.mulf %13, %14 : vector<8x32xf32>
    %16 = arith.addf %5, %15 : vector<8x32xf32>
    %c0_13 = arith.constant 0 : index
    %c0_14 = arith.constant 0 : index
    %17 = vector.load %arg9[%c0_13, %c0_14] : memref<8x32xf32, #tpu.memory_space<vmem>>, vector<8x32xf32>
    tpu.vector_store %arg9[%c0_13, %c0_14], %16 {strides = array<i32>} : memref<8x32xf32, #tpu.memory_space<vmem>>, vector<8x32xf32>,
    %c0_15 = arith.constant 0 : index
    %c0_16 = arith.constant 0 : index
    %18 = vector.load %arg7[%c0_15, %c0_16] : memref<32x64xf32, #tpu.memory_space<vmem>>, vector<32x64xf32>
    %cst_17 = arith.constant dense<0.000000e+00> : vector<8x64xf32>
    %19 = tpu.matmul %16, %18, %cst_17 {dimension_numbers = #tpu.dot_dimension_numbers<[1], [0], [0], [1], [0, 0, 1, 1], [], []>} : vector<8x32xf32>, vector<32x64xf32>, vector<8x64xf32> -> vector<8x64xf32>
    %c0_18 = arith.constant 0 : index
    %c0_19 = arith.constant 0 : index
    %20 = vector.load %arg8[%c0_18, %c0_19] : memref<1x64xf32, #tpu.memory_space<vmem>>, vector<1x64xf32>
    %21 = vector.broadcast %20 : vector<1x64xf32> to vector<8x64xf32>
    %22 = arith.addf %19, %21 : vector<8x64xf32>
    %23 = math.tanh %22 : vector<8x64xf32>
    %c0_20 = arith.constant 0 : index
    %c0_21 = arith.constant 0 : index
    %24 = vector.load %arg10[%c0_20, %c0_21] : memref<8x64xf32, #tpu.memory_space<vmem>>, vector<8x64xf32>
    tpu.vector_store %arg10[%c0_20, %c0_21], %23 {strides = array<i32>} : memref<8x64xf32, #tpu.memory_space<vmem>>, vector<8x64xf32>,
    %cst_22 = arith.constant 1.000000e+00 : f32
    %25 = vector.broadcast %cst_22 : f32 to vector<8x32xf32>
    %26 = arith.addf %25, %10 : vector<8x32xf32>
    %27 = arith.mulf %5, %5 : vector<8x32xf32>
    %28 = arith.subf %26, %27 : vector<8x32xf32>
    %29 = math.exp %10 : vector<8x32xf32>
    %30 = arith.subf %28, %29 : vector<8x32xf32>
    %cst_23 = arith.constant dense<0.000000e+00> : vector<8xf32>
    %31 = vector.multi_reduction <add>, %30, %cst_23 [1] : vector<8x32xf32> to vector<8xf32>
    %32 = vector.shape_cast %31 : vector<8xf32> to vector<8x1xf32>
    %c0_24 = arith.constant 0 : index
    %c0_25 = arith.constant 0 : index
    %33 = vector.load %arg11[%c0_24, %c0_25] : memref<8x1xf32, #tpu.memory_space<vmem>>, vector<8x1xf32>
    tpu.vector_store %arg11[%c0_24, %c0_25], %32 {strides = array<i32>} : memref<8x1xf32, #tpu.memory_space<vmem>>, vector<8x1xf32>,
    return
  }
  func.func @transform_0(%arg0: i32) -> (i32, i32) {
    %c0_i32 = arith.constant 0 : i32
    %c0_i32_0 = arith.constant 0 : i32
    return %arg0, %c0_i32 : i32, i32
  }
  func.func @transform_1(%arg0: i32) -> (i32, i32) {
    %c0_i32 = arith.constant 0 : i32
    %c0_i32_0 = arith.constant 0 : i32
    return %arg0, %c0_i32 : i32, i32
  }
  func.func @transform_2(%arg0: i32) -> (i32, i32) {
    %c0_i32 = arith.constant 0 : i32
    %c0_i32_0 = arith.constant 0 : i32
    %c0_i32_1 = arith.constant 0 : i32
    return %c0_i32, %c0_i32_0 : i32, i32
  }
  func.func @transform_3(%arg0: i32) -> (i32, i32) {
    %c0_i32 = arith.constant 0 : i32
    %c0_i32_0 = arith.constant 0 : i32
    %c0_i32_1 = arith.constant 0 : i32
    return %c0_i32, %c0_i32_0 : i32, i32
  }
  func.func @transform_4(%arg0: i32) -> (i32, i32) {
    %c0_i32 = arith.constant 0 : i32
    %c0_i32_0 = arith.constant 0 : i32
    %c0_i32_1 = arith.constant 0 : i32
    return %c0_i32, %c0_i32_0 : i32, i32
  }
  func.func @transform_5(%arg0: i32) -> (i32, i32) {
    %c0_i32 = arith.constant 0 : i32
    %c0_i32_0 = arith.constant 0 : i32
    %c0_i32_1 = arith.constant 0 : i32
    return %c0_i32, %c0_i32_0 : i32, i32
  }
  func.func @transform_6(%arg0: i32) -> (i32, i32) {
    %c0_i32 = arith.constant 0 : i32
    %c0_i32_0 = arith.constant 0 : i32
    %c0_i32_1 = arith.constant 0 : i32
    return %c0_i32, %c0_i32_0 : i32, i32
  }
  func.func @transform_7(%arg0: i32) -> (i32, i32) {
    %c0_i32 = arith.constant 0 : i32
    %c0_i32_0 = arith.constant 0 : i32
    %c0_i32_1 = arith.constant 0 : i32
    return %c0_i32, %c0_i32_0 : i32, i32
  }
  func.func @transform_8(%arg0: i32) -> (i32, i32) {
    %c0_i32 = arith.constant 0 : i32
    %c0_i32_0 = arith.constant 0 : i32
    return %arg0, %c0_i32 : i32, i32
  }
  func.func @transform_9(%arg0: i32) -> (i32, i32) {
    %c0_i32 = arith.constant 0 : i32
    %c0_i32_0 = arith.constant 0 : i32
    return %arg0, %c0_i32 : i32, i32
  }
  func.func @transform_10(%arg0: i32) -> (i32, i32) {
    %c0_i32 = arith.constant 0 : i32
    %c0_i32_0 = arith.constant 0 : i32
    return %arg0, %c0_i32 : i32, i32
  }
}

</mosaic_0001>

<llo_original>
// kernel: tpu_custom_call.1
$region0: #{tpu_custom_call.1}
  #allocation0 [shape = 'u32[]', space=smem, size = 0x4, offset = 0x4, fixed_abs, tag = 'smem constant byte address 0x4 - core index']
  #allocation1 [shape = 'u32[144,128]{1,0:T(1,128)}', space=vmem, size = 0x12000, scoped, tag = 'internal scratch']
  %s0 = inlined_call_operand.vmem [shape: f32[8,64], index: 0, kind: input, shape index: {}]
  %s1 = inlined_call_operand.vmem [shape: f32[8,32], index: 1, kind: input, shape index: {}]
  %s2 = inlined_call_operand.vmem [shape: f32[64,32], index: 2, kind: input, shape index: {}]
  %s3 = inlined_call_operand.vmem [shape: f32[1,32], index: 3, kind: input, shape index: {}]
  %s4 = inlined_call_operand.vmem [shape: f32[64,32], index: 4, kind: input, shape index: {}]
  %s5 = inlined_call_operand.vmem [shape: f32[1,32], index: 5, kind: input, shape index: {}]
  %s6 = inlined_call_operand.vmem [shape: f32[32,64], index: 6, kind: input, shape index: {}]
  %s7 = inlined_call_operand.vmem [shape: f32[1,64], index: 7, kind: input, shape index: {}]
  %s8 = inlined_call_operand.hbm [shape: f32[8,32], index: 8, kind: output, shape index: {0}]
  %s9 = inlined_call_operand.hbm [shape: f32[8,64], index: 9, kind: output, shape index: {1}]
  %s10 = inlined_call_operand.vmem [shape: f32[8,1], index: 10, kind: output, shape index: {2}]
  %11 = xla_tuple %s8, %s9, %s10
  %s12 = sld [smem:[#allocation0]]
  $region58: #{tpu_custom_call.1} parent=0
    _
  %s14 = ssub.s32 1, %s12
  %s15 = scalar_select 0, %s14, %s12
  $region1: #{tpu_custom_call.1} parent=0
    #allocation2 [shape = 'u8[4096]{0}', space=vmem, size = 0x1000, scoped, tag = 'output window, operand 0, single buffered']
    #allocation3 [shape = 's32[1]{0}', space=sflag, size = 0x4, scoped, tag = 'scoped memory for tpu_custom_call.1']
    #allocation4 [shape = 'u8[4096]{0}', space=vmem, size = 0x1000, scoped, tag = 'output window, operand 1, single buffered']
    #allocation5 [shape = 's32[1]{0}', space=sflag, size = 0x4, scoped, tag = 'scoped memory for tpu_custom_call.1']
    %16 = vsyncpa [#allocation3], 0
    %17 = vsyncpa [#allocation5], 0
    // Predicated region
    $region2: #{tpu_custom_call.1} parent=1 // pred_check
      _
    $region3: #{tpu_custom_call.1} parent=1 // pred_check_branch
      %19 = sbr.rel (0) target = $region5
    $region4: #{tpu_custom_call.1} parent=1 // pred_region
      _
    $region5: #{tpu_custom_call.1} parent=1 // pred_fallthru
      _
    // Predicated region
    $region6: #{tpu_custom_call.1} parent=1 // pred_check
      _
    $region7: #{tpu_custom_call.1} parent=1 // pred_check_branch
      %21 = sbr.rel (0) target = $region9
    $region8: #{tpu_custom_call.1} parent=1 // pred_region
      _
    $region9: #{tpu_custom_call.1} parent=1 // pred_fallthru
      _
    // Predicated region
    $region10: #{tpu_custom_call.1} parent=1 // pred_check
      _
    $region11: #{tpu_custom_call.1} parent=1 // pred_check_branch
      %23 = sbr.rel (0) target = $region13
    $region12: #{tpu_custom_call.1} parent=1 // pred_region
      _
    $region13: #{tpu_custom_call.1} parent=1 // pred_fallthru
      _
    // Predicated region
    $region14: #{tpu_custom_call.1} parent=1 // pred_check
      _
    $region15: #{tpu_custom_call.1} parent=1 // pred_check_branch
      %25 = sbr.rel (0) target = $region17
    $region16: #{tpu_custom_call.1} parent=1 // pred_region
      _
    $region17: #{tpu_custom_call.1} parent=1 // pred_fallthru
      _
    // Predicated region
    $region18: #{tpu_custom_call.1} parent=1 // pred_check
      _
    $region19: #{tpu_custom_call.1} parent=1 // pred_check_branch
      %27 = sbr.rel (0) target = $region21
    $region20: #{tpu_custom_call.1} parent=1 // pred_region
      _
    $region21: #{tpu_custom_call.1} parent=1 // pred_fallthru
      _
    // Predicated region
    $region22: #{tpu_custom_call.1} parent=1 // pred_check
      _
    $region23: #{tpu_custom_call.1} parent=1 // pred_check_branch
      %29 = sbr.rel (0) target = $region25
    $region24: #{tpu_custom_call.1} parent=1 // pred_region
      _
    $region25: #{tpu_custom_call.1} parent=1 // pred_fallthru
      _
    // Predicated region
    $region26: #{tpu_custom_call.1} parent=1 // pred_check
      _
    $region27: #{tpu_custom_call.1} parent=1 // pred_check_branch
      %31 = sbr.rel (0) target = $region29
    $region28: #{tpu_custom_call.1} parent=1 // pred_region
      _
    $region29: #{tpu_custom_call.1} parent=1 // pred_fallthru
      _
    // Predicated region
    $region30: #{tpu_custom_call.1} parent=1 // pred_check
      _
    $region31: #{tpu_custom_call.1} parent=1 // pred_check_branch
      %33 = sbr.rel (0) target = $region33
    $region32: #{tpu_custom_call.1} parent=1 // pred_region
      _
    $region33: #{tpu_custom_call.1} parent=1 // pred_fallthru
      _
    %v34 = vld [vmem:[%s0] sm:$0xff]
    %v35 = vld [vmem:[%s2] sm:$0xff]
    %v36 = vld [vmem:[%s2 + $0x8] sm:$0xff]
    %v37 = vld [vmem:[%s2 + $0x10] sm:$0xff]
    %v38 = vld [vmem:[%s2 + $0x18] sm:$0xff]
    %v39 = vld [vmem:[%s2 + $0x20] sm:$0xff]
    %v40 = vld [vmem:[%s2 + $0x28] sm:$0xff]
    %v41 = vld [vmem:[%s2 + $0x30] sm:$0xff]
    %v42 = vld [vmem:[%s2 + $0x38] sm:$0xff]
    %v43 = vld [vmem:[%s3] sm:$0x1]
    %v45 = vlaneseq
    %v46 = vshrl.u32 %v45, 7
    %v47 = vsub.s32 0, %v46
    %v48 = vrot.slane %v43, %v47
    %vm50 = vcmask 523264
    %v52 = vsel %vm50, %v34, 0
    %54 = vmatprep.subr.mxu0 0.0
    %55 = vmatpush1.msra.mxu0 %v35
    %56 = vmatprep.subr.mxu0 0.0
    %57 = vmatpush1.msra.mxu0 %v36
    %58 = vmatprep.subr.mxu0 0.0
    %59 = vmatpush1.msra.mxu0 %v37
    %60 = vmatprep.subr.mxu0 0.0
    %61 = vmatpush1.msra.mxu0 %v38
    %62 = vmatprep.subr.mxu0 0.0
    %63 = vmatpush1.msra.mxu0 %v39
    %64 = vmatprep.subr.mxu0 0.0
    %65 = vmatpush1.msra.mxu0 %v40
    %66 = vmatprep.subr.mxu0 0.0
    %67 = vmatpush1.msra.mxu0 %v41
    %68 = vmatprep.subr.mxu0 0.0
    %69 = vmatpush1.msra.mxu0 %v42
    %70 = vmatprep.subr.mxu0 0.0
    %71 = vmatpush1.msra.mxu0 0.0
    %72 = vmatprep.subr.mxu0 0.0
    %73 = vmatpush1.msra.mxu0 0.0
    %74 = vmatprep.subr.mxu0 0.0
    %75 = vmatpush1.msra.mxu0 0.0
    %76 = vmatprep.subr.mxu0 0.0
    %77 = vmatpush1.msra.mxu0 0.0
    %78 = vmatprep.subr.mxu0 0.0
    %79 = vmatpush1.msra.mxu0 0.0
    %80 = vmatprep.subr.mxu0 0.0
    %81 = vmatpush1.msra.mxu0 0.0
    %82 = vmatprep.subr.mxu0 0.0
    %83 = vmatpush1.msra.mxu0 0.0
    %84 = vmatprep.subr.mxu0 0.0
    %85 = vmatpush1.msra.mxu0 0.0
    %86 = vmatprep.subr.mxu0 0.0
    %87 = vmatpush1.msra.mxu0 0.0
    %88 = vmatprep.subr.mxu0 0.0
    %89 = vmatpush1.msra.mxu0 0.0
    %90 = vmatprep.subr.mxu0 0.0
    %91 = vmatpush1.msra.mxu0 0.0
    %92 = vmatprep.subr.mxu0 0.0
    %93 = vmatpush1.msra.mxu0 0.0
    %94 = vmatprep.subr.mxu0 0.0
    %95 = vmatpush1.msra.mxu0 0.0
    %96 = vmatprep.subr.mxu0 0.0
    %97 = vmatpush1.msra.mxu0 0.0
    %98 = vmatprep.subr.mxu0 0.0
    %99 = vmatpush1.msra.mxu0 0.0
    %100 = vmatprep.subr.mxu0 0.0
    %101 = vmatpush1.msra.mxu0 0.0
    %102 = vmatprep.subr.mxu0 0.0
    %103 = vmatpush1.msra.mxu0 0.0
    %104 = vmatprep.subr.mxu0 0.0
    %105 = vmatpush1.msra.mxu0 0.0
    %106 = vmatprep.subr.mxu0 0.0
    %107 = vmatpush1.msra.mxu0 0.0
    %108 = vmatprep.subr.mxu0 0.0
    %109 = vmatpush1.msra.mxu0 0.0
    %110 = vmatprep.subr.mxu0 0.0
    %111 = vmatpush1.msra.mxu0 0.0
    %112 = vmatprep.subr.mxu0 0.0
    %113 = vmatpush1.msra.mxu0 0.0
    %114 = vmatprep.subr.mxu0 0.0
    %115 = vmatpush1.msra.mxu0 0.0
    %116 = vmatprep.subr.mxu0 0.0
    %117 = vmatpush1.msra.mxu0 0.0
    %118 = vmatprep.mubr.f32.mxu0 0.0
    %119 = vmatmul.mubr.f32.gmra.mrb[0].mxu0 %v52
    %v120 = vpop.f32.mrb[0].mxu0
    %v121 = vadd.f32 %v48, %v120
    %v122 = vpop.f32.mrb[0].mxu0
    %123 = vdwg.mxu0
    %v124 = vld [vmem:[%s4] sm:$0xff]
    %v125 = vld [vmem:[%s4 + $0x8] sm:$0xff]
    %v126 = vld [vmem:[%s4 + $0x10] sm:$0xff]
    %v127 = vld [vmem:[%s4 + $0x18] sm:$0xff]
    %v128 = vld [vmem:[%s4 + $0x20] sm:$0xff]
    %v129 = vld [vmem:[%s4 + $0x28] sm:$0xff]
    %v130 = vld [vmem:[%s4 + $0x30] sm:$0xff]
    %v131 = vld [vmem:[%s4 + $0x38] sm:$0xff]
    %v132 = vld [vmem:[%s5] sm:$0x1]
    %v134 = vlaneseq
    %v135 = vshrl.u32 %v134, 7
    %v136 = vsub.s32 0, %v135
    %v137 = vrot.slane %v132, %v136
    %139 = vmatprep.subr.mxu0 0.0
    %140 = vmatpush1.msra.mxu0 %v124
    %141 = vmatprep.subr.mxu0 0.0
    %142 = vmatpush1.msra.mxu0 %v125
    %143 = vmatprep.subr.mxu0 0.0
    %144 = vmatpush1.msra.mxu0 %v126
    %145 = vmatprep.subr.mxu0 0.0
    %146 = vmatpush1.msra.mxu0 %v127
    %147 = vmatprep.subr.mxu0 0.0
    %148 = vmatpush1.msra.mxu0 %v128
    %149 = vmatprep.subr.mxu0 0.0
    %150 = vmatpush1.msra.mxu0 %v129
    %151 = vmatprep.subr.mxu0 0.0
    %152 = vmatpush1.msra.mxu0 %v130
    %153 = vmatprep.subr.mxu0 0.0
    %154 = vmatpush1.msra.mxu0 %v131
    %155 = vmatprep.subr.mxu0 0.0
    %156 = vmatpush1.msra.mxu0 0.0
    %157 = vmatprep.subr.mxu0 0.0
    %158 = vmatpush1.msra.mxu0 0.0
    %159 = vmatprep.subr.mxu0 0.0
    %160 = vmatpush1.msra.mxu0 0.0
    %161 = vmatprep.subr.mxu0 0.0
    %162 = vmatpush1.msra.mxu0 0.0
    %163 = vmatprep.subr.mxu0 0.0
    %164 = vmatpush1.msra.mxu0 0.0
    %165 = vmatprep.subr.mxu0 0.0
    %166 = vmatpush1.msra.mxu0 0.0
    %167 = vmatprep.subr.mxu0 0.0
    %168 = vmatpush1.msra.mxu0 0.0
    %169 = vmatprep.subr.mxu0 0.0
    %170 = vmatpush1.msra.mxu0 0.0
    %171 = vmatprep.subr.mxu0 0.0
    %172 = vmatpush1.msra.mxu0 0.0
    %173 = vmatprep.subr.mxu0 0.0
    %174 = vmatpush1.msra.mxu0 0.0
    %175 = vmatprep.subr.mxu0 0.0
    %176 = vmatpush1.msra.mxu0 0.0
    %177 = vmatprep.subr.mxu0 0.0
    %178 = vmatpush1.msra.mxu0 0.0
    %179 = vmatprep.subr.mxu0 0.0
    %180 = vmatpush1.msra.mxu0 0.0
    %181 = vmatprep.subr.mxu0 0.0
    %182 = vmatpush1.msra.mxu0 0.0
    %183 = vmatprep.subr.mxu0 0.0
    %184 = vmatpush1.msra.mxu0 0.0
    %185 = vmatprep.subr.mxu0 0.0
    %186 = vmatpush1.msra.mxu0 0.0
    %187 = vmatprep.subr.mxu0 0.0
    %188 = vmatpush1.msra.mxu0 0.0
    %189 = vmatprep.subr.mxu0 0.0
    %190 = vmatpush1.msra.mxu0 0.0
    %191 = vmatprep.subr.mxu0 0.0
    %192 = vmatpush1.msra.mxu0 0.0
    %193 = vmatprep.subr.mxu0 0.0
    %194 = vmatpush1.msra.mxu0 0.0
    %195 = vmatprep.subr.mxu0 0.0
    %196 = vmatpush1.msra.mxu0 0.0
    %197 = vmatprep.subr.mxu0 0.0
    %198 = vmatpush1.msra.mxu0 0.0
    %199 = vmatprep.subr.mxu0 0.0
    %200 = vmatpush1.msra.mxu0 0.0
    %201 = vmatprep.subr.mxu0 0.0
    %202 = vmatpush1.msra.mxu0 0.0
    %203 = vmatprep.mubr.f32.mxu0 0.0
    %204 = vmatmul.mubr.f32.gmra.mrb[0].mxu0 %v52
    %v205 = vpop.f32.mrb[0].mxu0
    %v206 = vadd.f32 %v137, %v205
    %v207 = vpop.f32.mrb[0].mxu0
    %208 = vdwg.mxu0
    %v209 = vmul.f32 %v206, 0.5
    %v210 = vmul.f32 %v209, 1.442695
    %v211 = vpow.pop %v210
    %v212 = vld [vmem:[%s1] sm:$0xff]
    %v213 = vmul.f32 %v211, %v212
    %v214 = vadd.f32 %v121, %v213
    %vm215 = vcmask 261120
    %216 = vst.msk [vmem:[#allocation2] sm:$0xff] %vm215, %v214
    %v217 = vld [vmem:[%s6] sm:$0xff]
    %v218 = vld [vmem:[%s6 + $0x8] sm:$0xff]
    %v219 = vld [vmem:[%s6 + $0x10] sm:$0xff]
    %v220 = vld [vmem:[%s6 + $0x18] sm:$0xff]
    %v221 = vld [vmem:[%s7] sm:$0x1]
    %v223 = vlaneseq
    %v224 = vshrl.u32 %v223, 7
    %v225 = vsub.s32 0, %v224
    %v226 = vrot.slane %v221, %v225
    %v229 = vsel %vm215, %v214, 0
    %231 = vmatprep.subr.mxu0 0.0
    %232 = vmatpush1.msra.mxu0 %v217
    %233 = vmatprep.subr.mxu0 0.0
    %234 = vmatpush1.msra.mxu0 %v218
    %235 = vmatprep.subr.mxu0 0.0
    %236 = vmatpush1.msra.mxu0 %v219
    %237 = vmatprep.subr.mxu0 0.0
    %238 = vmatpush1.msra.mxu0 %v220
    %239 = vmatprep.subr.mxu0 0.0
    %240 = vmatpush1.msra.mxu0 0.0
    %241 = vmatprep.subr.mxu0 0.0
    %242 = vmatpush1.msra.mxu0 0.0
    %243 = vmatprep.subr.mxu0 0.0
    %244 = vmatpush1.msra.mxu0 0.0
    %245 = vmatprep.subr.mxu0 0.0
    %246 = vmatpush1.msra.mxu0 0.0
    %247 = vmatprep.subr.mxu0 0.0
    %248 = vmatpush1.msra.mxu0 0.0
    %249 = vmatprep.subr.mxu0 0.0
    %250 = vmatpush1.msra.mxu0 0.0
    %251 = vmatprep.subr.mxu0 0.0
    %252 = vmatpush1.msra.mxu0 0.0
    %253 = vmatprep.subr.mxu0 0.0
    %254 = vmatpush1.msra.mxu0 0.0
    %255 = vmatprep.subr.mxu0 0.0
    %256 = vmatpush1.msra.mxu0 0.0
    %257 = vmatprep.subr.mxu0 0.0
    %258 = vmatpush1.msra.mxu0 0.0
    %259 = vmatprep.subr.mxu0 0.0
    %260 = vmatpush1.msra.mxu0 0.0
    %261 = vmatprep.subr.mxu0 0.0
    %262 = vmatpush1.msra.mxu0 0.0
    %263 = vmatprep.subr.mxu0 0.0
    %264 = vmatpush1.msra.mxu0 0.0
    %265 = vmatprep.subr.mxu0 0.0
    %266 = vmatpush1.msra.mxu0 0.0
    %267 = vmatprep.subr.mxu0 0.0
    %268 = vmatpush1.msra.mxu0 0.0
    %269 = vmatprep.subr.mxu0 0.0
    %270 = vmatpush1.msra.mxu0 0.0
    %271 = vmatprep.subr.mxu0 0.0
    %272 = vmatpush1.msra.mxu0 0.0
    %273 = vmatprep.subr.mxu0 0.0
    %274 = vmatpush1.msra.mxu0 0.0
    %275 = vmatprep.subr.mxu0 0.0
    %276 = vmatpush1.msra.mxu0 0.0
    %277 = vmatprep.subr.mxu0 0.0
    %278 = vmatpush1.msra.mxu0 0.0
    %279 = vmatprep.subr.mxu0 0.0
    %280 = vmatpush1.msra.mxu0 0.0
    %281 = vmatprep.subr.mxu0 0.0
    %282 = vmatpush1.msra.mxu0 0.0
    %283 = vmatprep.subr.mxu0 0.0
    %284 = vmatpush1.msra.mxu0 0.0
    %285 = vmatprep.subr.mxu0 0.0
    %286 = vmatpush1.msra.mxu0 0.0
    %287 = vmatprep.subr.mxu0 0.0
    %288 = vmatpush1.msra.mxu0 0.0
    %289 = vmatprep.subr.mxu0 0.0
    %290 = vmatpush1.msra.mxu0 0.0
    %291 = vmatprep.subr.mxu0 0.0
    %292 = vmatpush1.msra.mxu0 0.0
    %293 = vmatprep.subr.mxu0 0.0
    %294 = vmatpush1.msra.mxu0 0.0
    %295 = vmatprep.mubr.f32.mxu0 0.0
    %296 = vmatmul.mubr.f32.gmra.mrb[0].mxu0 %v229
    %v297 = vpop.f32.mrb[0].mxu0
    %v298 = vadd.f32 %v226, %v297
    %v299 = vpop.f32.mrb[0].mxu0
    %300 = vdwg.mxu0
    %v301 = vtanh.pop %v298
    %302 = vst.msk [vmem:[#allocation4] sm:$0xff] %vm50, %v301
    %v303 = vadd.f32 %v206, 1.0
    %v304 = vmul.f32 %v121, %v121
    %v305 = vsub.f32 %v303, %v304
    %v306 = vmul.f32 %v206, 1.442695
    %v307 = vpow.pop %v306
    %v308 = vsub.f32 %v305, %v307
    %v309 = vsel %vm215, %v308, 0.0
    %310 = vadd.xlane.f32.xlu0 %v309
    %v311 = vpop.xlane.xlu0 %310
    %vm312 = vcmask 7168
    %313 = vst.msk [vmem:[%s10] sm:$0xff] %vm312, %v311
    // Predicated region
    $region34: #{tpu_custom_call.1} parent=1 // pred_check
      _
    $region35: #{tpu_custom_call.1} parent=1 // pred_check_branch
      %315 = sbr.rel (0) target = $region37
    $region36: #{tpu_custom_call.1} parent=1 // pred_region
      %s317 = ssub.s32 128, 128
      %318 = vsyncadd [#allocation3], %s317
      %s320 = sshll.u32 [#allocation2], 4
      %s321 = int_to_ptr.vmem [resolvable:$true] %s320
      %323 = dma.vmem_to_hbm [thread:$0]  %s321, 128, %s8, [#allocation3]
    $region37: #{tpu_custom_call.1} parent=1 // pred_fallthru
      _
    // Predicated region
    $region38: #{tpu_custom_call.1} parent=1 // pred_check
      _
    $region39: #{tpu_custom_call.1} parent=1 // pred_check_branch
      %325 = sbr.rel (0) target = $region41
    $region40: #{tpu_custom_call.1} parent=1 // pred_region
      %s327 = ssub.s32 128, 128
      %328 = vsyncadd [#allocation5], %s327
      %s330 = sshll.u32 [#allocation4], 4
      %s331 = int_to_ptr.vmem [resolvable:$true] %s330
      %333 = dma.vmem_to_hbm [thread:$0]  %s331, 128, %s9, [#allocation5]
    $region41: #{tpu_custom_call.1} parent=1 // pred_fallthru
      _
    // Predicated region
    $region42: #{tpu_custom_call.1} parent=1 // pred_check
      _
    $region43: #{tpu_custom_call.1} parent=1 // pred_check_branch
      %335 = sbr.rel (0) target = $region45
    $region44: #{tpu_custom_call.1} parent=1 // pred_region
      _
    $region45: #{tpu_custom_call.1} parent=1 // pred_fallthru
      _
    // Predicated region
    $region46: #{tpu_custom_call.1} parent=1 // pred_check
      _
    $region47: #{tpu_custom_call.1} parent=1 // pred_check_branch
      %337 = sbr.rel (0) target = $region49
    $region48: #{tpu_custom_call.1} parent=1 // pred_region
      %338 = dma.done [#allocation3], 128
    $region49: #{tpu_custom_call.1} parent=1 // pred_fallthru
      _
    // Predicated region
    $region50: #{tpu_custom_call.1} parent=1 // pred_check
      _
    $region51: #{tpu_custom_call.1} parent=1 // pred_check_branch
      %340 = sbr.rel (0) target = $region53
    $region52: #{tpu_custom_call.1} parent=1 // pred_region
      %341 = dma.done [#allocation5], 128
    $region53: #{tpu_custom_call.1} parent=1 // pred_fallthru
      _
    // Predicated region
    $region54: #{tpu_custom_call.1} parent=1 // pred_check
      _
    $region55: #{tpu_custom_call.1} parent=1 // pred_check_branch
      %343 = sbr.rel (0) target = $region57
    $region56: #{tpu_custom_call.1} parent=1 // pred_region
      _
    $region57: #{tpu_custom_call.1} parent=1 // pred_fallthru
      _
    %344 = vsyncpa [#allocation3], 1
    %345 = vsyncpa [#allocation5], 1

</llo_original>
